<compile_context>
chip_gen: v7x
topology: tpu7x:2x2x1
jax: 0.10.0
libtpu: 0.0.40
codegen_flags: <defaults>
</compile_context>

<pallas_src>
import functools
import math

import jax
import jax.numpy as jnp
import numpy as np
from jax.experimental import pallas as pl
from jax.experimental.pallas import tpu as pltpu

_VMEM_LIMIT = 48 * 1024 * 1024   # fits v7x (64 MiB) with headroom; fine on v5e/v6e

# Tile targets: multiples of 256 for the v6e/v7x MXU (v5e's 128x128 divides them
# too).  _pick_tile falls back to the full dimension for small shapes.
_TM = 256      # matmul / layernorm row tile   (v5e could use 512: more VMEM, lower HBM BW)
_TQ = 256      # attention query tile
_TKV = 512     # attention key/value tile


def _cparams(semantics):
    return pltpu.CompilerParams(dimension_semantics=semantics,
                                vmem_limit_bytes=_VMEM_LIMIT)


def _pick_tile(dim, target, mult=16):
    """Largest divisor of `dim` <= target, preferring multiples of `mult`.

    A block equal to the full dim is always legal, so small dims use one block.
    """
    if dim <= target:
        return dim
    fallback = 1
    for t in range(target, 0, -1):
        if dim % t == 0:
            if t % mult == 0:
                return t
            if fallback == 1:
                fallback = t
    return fallback   # awkward dims: still a valid divisor (may be slower)


# ---------------------------------------------------------------------------
# exact-GELU (erf) via A&S 7.1.26 polynomial (|err| < 1.5e-7, uses only exp)
# ---------------------------------------------------------------------------
def _erf(x):
    a1, a2, a3, a4, a5 = (0.254829592, -0.284496736, 1.421413741,
                          -1.453152027, 1.061405429)
    pc = 0.3275911
    sgn = jnp.where(x >= 0.0, 1.0, -1.0)
    ax = jnp.abs(x)
    t = 1.0 / (1.0 + pc * ax)
    poly = ((((a5 * t + a4) * t + a3) * t + a2) * t + a1) * t
    return sgn * (1.0 - poly * jnp.exp(-ax * ax))


def _gelu_erf(x):
    return 0.5 * x * (1.0 + _erf(x * 0.7071067811865475))


def _layernorm(y, g, b, eps):
    mu = jnp.mean(y, axis=-1, keepdims=True)
    var = jnp.mean((y - mu) ** 2, axis=-1, keepdims=True)
    return (y - mu) * jax.lax.rsqrt(var + eps) * g + b


# ---------------------------------------------------------------------------
# weight-resident matmul (optionally fused residual-add + LayerNorm epilogue)
# grid = (M//tm,): the full (K, N) weight block is DMA'd once and stays in VMEM
# ---------------------------------------------------------------------------
def _matmul_kernel(*refs, fuse_ln, eps):
    if fuse_ln:
        x_ref, w_ref, b_ref, res_ref, g_ref, beta_ref, o_ref = refs
    else:
        x_ref, w_ref, b_ref, o_ref = refs
    y = jnp.dot(x_ref[...], w_ref[...],
                preferred_element_type=jnp.float32) + b_ref[...]
    if fuse_ln:
        y = y + res_ref[...].astype(jnp.float32)
        y = _layernorm(y, g_ref[...], beta_ref[...], eps)
    o_ref[...] = y.astype(o_ref.dtype)


def pallas_matmul(x, w, b, *, residual=None, ln=None, eps=1e-12,
                  out_dtype=jnp.bfloat16):
    M, K = x.shape
    N = w.shape[1]
    tm = _pick_tile(M, _TM)
    in_specs = [pl.BlockSpec((tm, K), lambda i: (i, 0)),
                pl.BlockSpec((K, N), lambda i: (0, 0)),    # constant -> resident
                pl.BlockSpec((1, N), lambda i: (0, 0))]
    args = [x, w, b]
    fuse_ln = residual is not None
    if fuse_ln:
        g, beta = ln
        in_specs += [pl.BlockSpec((tm, N), lambda i: (i, 0)),
                     pl.BlockSpec((1, N), lambda i: (0, 0)),
                     pl.BlockSpec((1, N), lambda i: (0, 0))]
        args += [residual, g, beta]
    return pl.pallas_call(
        functools.partial(_matmul_kernel, fuse_ln=fuse_ln, eps=eps),
        grid=(M // tm,),
        in_specs=in_specs,
        out_specs=pl.BlockSpec((tm, N), lambda i: (i, 0)),
        out_shape=jax.ShapeDtypeStruct((M, N), out_dtype),
        compiler_params=_cparams(("parallel",)),
    )(*args)


# ---------------------------------------------------------------------------
# fused QKV projection: one pass over x, weights resident, three [M, H] outputs
# (no XLA split / head transpose afterwards)
# ---------------------------------------------------------------------------
def _qkv_kernel(x_ref, w_ref, b_ref, q_ref, k_ref, v_ref, *, H):
    y = jnp.dot(x_ref[...], w_ref[...],
                preferred_element_type=jnp.float32) + b_ref[...]
    q_ref[...] = y[:, :H].astype(q_ref.dtype)
    k_ref[...] = y[:, H:2 * H].astype(k_ref.dtype)
    v_ref[...] = y[:, 2 * H:].astype(v_ref.dtype)


def pallas_qkv(x, w, b, H):
    M, K = x.shape
    tm = _pick_tile(M, _TM)
    out_spec = pl.BlockSpec((tm, H), lambda i: (i, 0))
    return pl.pallas_call(
        functools.partial(_qkv_kernel, H=H),
        grid=(M // tm,),
        in_specs=[pl.BlockSpec((tm, K), lambda i: (i, 0)),
                  pl.BlockSpec((K, 3 * H), lambda i: (0, 0)),
                  pl.BlockSpec((1, 3 * H), lambda i: (0, 0))],
        out_specs=(out_spec, out_spec, out_spec),
        out_shape=(jax.ShapeDtypeStruct((M, H), jnp.bfloat16),
                   jax.ShapeDtypeStruct((M, H), jnp.bfloat16),
                   jax.ShapeDtypeStruct((M, H), jnp.bfloat16)),
        compiler_params=_cparams(("parallel",)),
    )(x, w, b)


# ---------------------------------------------------------------------------
# fused FFN: GELU(x@wi+bi) @ wo2 + bo2, + residual, LayerNorm — the [tm, I]
# intermediate never leaves VMEM; both weights stay resident
# ---------------------------------------------------------------------------
def _ffn_kernel(x_ref, wi_ref, bi_ref, wo2_ref, bo2_ref, g_ref, beta_ref, o_ref,
                *, eps):
    x = x_ref[...]
    h = jnp.dot(x, wi_ref[...], preferred_element_type=jnp.float32) + bi_ref[...]
    h = _gelu_erf(h)
    y = jnp.dot(h.astype(wo2_ref.dtype), wo2_ref[...],
                preferred_element_type=jnp.float32) + bo2_ref[...]
    y = y + x.astype(jnp.float32)
    o_ref[...] = _layernorm(y, g_ref[...], beta_ref[...], eps).astype(o_ref.dtype)


def pallas_ffn(x, wi, bi, wo2, bo2, g, beta, *, eps=1e-12, out_dtype=jnp.bfloat16):
    M, H = x.shape
    I = wi.shape[1]
    tm = _pick_tile(M, _TM)
    return pl.pallas_call(
        functools.partial(_ffn_kernel, eps=eps),
        grid=(M // tm,),
        in_specs=[pl.BlockSpec((tm, H), lambda i: (i, 0)),
                  pl.BlockSpec((H, I), lambda i: (0, 0)),
                  pl.BlockSpec((1, I), lambda i: (0, 0)),
                  pl.BlockSpec((I, H), lambda i: (0, 0)),
                  pl.BlockSpec((1, H), lambda i: (0, 0)),
                  pl.BlockSpec((1, H), lambda i: (0, 0)),
                  pl.BlockSpec((1, H), lambda i: (0, 0))],
        out_specs=pl.BlockSpec((tm, H), lambda i: (i, 0)),
        out_shape=jax.ShapeDtypeStruct((M, H), out_dtype),
        compiler_params=_cparams(("parallel",)),
    )(x, wi, bi, wo2, bo2, g, beta)


# ---------------------------------------------------------------------------
# embeddings: add + LayerNorm (row-tiled)
# ---------------------------------------------------------------------------
def _add_ln_kernel(x_ref, r_ref, g_ref, b_ref, o_ref, *, eps):
    h = x_ref[...].astype(jnp.float32) + r_ref[...].astype(jnp.float32)
    o_ref[...] = _layernorm(h, g_ref[...], b_ref[...], eps).astype(o_ref.dtype)


def pallas_add_layernorm(x, res, g, b, eps, out_dtype=jnp.bfloat16):
    M, H = x.shape
    tm = _pick_tile(M, _TM)
    return pl.pallas_call(
        functools.partial(_add_ln_kernel, eps=eps),
        grid=(M // tm,),
        in_specs=[pl.BlockSpec((tm, H), lambda i: (i, 0)),
                  pl.BlockSpec((tm, H), lambda i: (i, 0)),
                  pl.BlockSpec((1, H), lambda i: (0, 0)),
                  pl.BlockSpec((1, H), lambda i: (0, 0))],
        out_specs=pl.BlockSpec((tm, H), lambda i: (i, 0)),
        out_shape=jax.ShapeDtypeStruct((M, H), out_dtype),
        compiler_params=_cparams(("parallel",)),
    )(x, res, g, b)


# ---------------------------------------------------------------------------
# flash-style attention: reads Q/K/V straight out of [B, S, H] (all heads per
# block, heads split in-kernel), online softmax, never materializes [.., S, S];
# ctx written lane-dense straight into [B, S, H].
# ---------------------------------------------------------------------------
def _flash_attn_kernel(q_ref, k_ref, v_ref, bias_ref, o_ref,
                       m_ref, l_ref, acc_ref, *, scale, nH, hd):
    kv = pl.program_id(2)

    @pl.when(kv == 0)
    def _():
        m_ref[...] = jnp.full_like(m_ref, -jnp.inf)
        l_ref[...] = jnp.zeros_like(l_ref)
        acc_ref[...] = jnp.zeros_like(acc_ref)

    q = q_ref[0]                 # [TQ, H]   bf16
    k = k_ref[0]                 # [TKV, H]  bf16
    v = v_ref[0]                 # [TKV, H]  bf16
    bias = bias_ref[0]           # [1, TKV]  fp32 additive key mask

    m_prev = m_ref[...]          # [TQ, nH]
    l_prev = l_ref[...]          # [TQ, nH]
    acc_prev = acc_ref[...]      # [TQ, H]

    m_out, l_out, acc_out = [], [], []
    for h in range(nH):          # static unroll over heads
        sl = slice(h * hd, (h + 1) * hd)
        s = jax.lax.dot_general(q[:, sl], k[:, sl], (((1,), (1,)), ((), ())),
                                preferred_element_type=jnp.float32) * scale + bias
        m_p = m_prev[:, h:h + 1]
        m_n = jnp.maximum(m_p, jnp.max(s, axis=-1, keepdims=True))
        alpha = jnp.exp(m_p - m_n)
        p = jnp.exp(s - m_n)
        l_out.append(alpha * l_prev[:, h:h + 1]
                     + jnp.sum(p, axis=-1, keepdims=True))
        acc_out.append(alpha * acc_prev[:, sl] + jax.lax.dot_general(
            p.astype(v.dtype), v[:, sl], (((1,), (0,)), ((), ())),
            preferred_element_type=jnp.float32))
        m_out.append(m_n)

    m_ref[...] = jnp.concatenate(m_out, axis=-1)
    l_ref[...] = jnp.concatenate(l_out, axis=-1)
    acc_ref[...] = jnp.concatenate(acc_out, axis=-1)

    @pl.when(kv == pl.num_programs(2) - 1)
    def _():
        outs = [acc_out[h] * pl.reciprocal(l_out[h], approx=True)
                for h in range(nH)]
        o_ref[0] = jnp.concatenate(outs, axis=-1).astype(o_ref.dtype)


def pallas_flash_attention(q, k, v, bias, scale, nH):
    B, S, H = q.shape
    hd = H // nH
    tq = _pick_tile(S, _TQ)
    tkv = _pick_tile(S, _TKV)
    grid = (B, S // tq, S // tkv)
    return pl.pallas_call(
        functools.partial(_flash_attn_kernel, scale=scale, nH=nH, hd=hd),
        grid=grid,
        in_specs=[pl.BlockSpec((1, tq, H), lambda b, qi, kv: (b, qi, 0)),
                  pl.BlockSpec((1, tkv, H), lambda b, qi, kv: (b, kv, 0)),
                  pl.BlockSpec((1, tkv, H), lambda b, qi, kv: (b, kv, 0)),
                  pl.BlockSpec((1, 1, tkv), lambda b, qi, kv: (b, 0, kv))],
        out_specs=pl.BlockSpec((1, tq, H), lambda b, qi, kv: (b, qi, 0)),
        out_shape=jax.ShapeDtypeStruct((B, S, H), jnp.bfloat16),
        scratch_shapes=[pltpu.VMEM((tq, nH), jnp.float32),
                        pltpu.VMEM((tq, nH), jnp.float32),
                        pltpu.VMEM((tq, H), jnp.float32)],
        compiler_params=_cparams(("parallel", "parallel", "arbitrary")),
    )(q, k, v, bias)


# ---------------------------------------------------------------------------
# classification head: Linear -> LayerNorm -> Linear -> softmax  (computed once;
# exact divide so probabilities sum to 1)
# ---------------------------------------------------------------------------
def _head_kernel(x_ref, w1_ref, b1_ref, g_ref, beta_ref, w2_ref, b2_ref, o_ref,
                 *, eps):
    x = x_ref[...]
    h = jnp.dot(x, w1_ref[...], preferred_element_type=jnp.float32) + b1_ref[...]
    h = _layernorm(h, g_ref[...], beta_ref[...], eps)
    s = jnp.dot(h.astype(w2_ref.dtype), w2_ref[...],
                preferred_element_type=jnp.float32) + b2_ref[...]
    m = jnp.max(s, axis=-1, keepdims=True)
    e = jnp.exp(s - m)
    o_ref[...] = (e / jnp.sum(e, axis=-1, keepdims=True)).astype(o_ref.dtype)


def pallas_head(cls_tok, hp, eps):
    B, H = cls_tok.shape
    tb = _pick_tile(B, _TM)
    return pl.pallas_call(
        functools.partial(_head_kernel, eps=eps),
        grid=(B // tb,),
        in_specs=[pl.BlockSpec((tb, H), lambda i: (i, 0)),
                  pl.BlockSpec((H, H), lambda i: (0, 0)),
                  pl.BlockSpec((1, H), lambda i: (0, 0)),
                  pl.BlockSpec((1, H), lambda i: (0, 0)),
                  pl.BlockSpec((1, H), lambda i: (0, 0)),
                  pl.BlockSpec((H, 2), lambda i: (0, 0)),
                  pl.BlockSpec((1, 2), lambda i: (0, 0))],
        out_specs=pl.BlockSpec((tb, 2), lambda i: (i, 0)),
        out_shape=jax.ShapeDtypeStruct((B, 2), jnp.float32),
        compiler_params=_cparams(("parallel",)),
    )(cls_tok, hp["w1"], hp["b1"], hp["ln_g"], hp["ln_b"], hp["w2"], hp["b2"])


# ---------------------------------------------------------------------------
# parameter init (deterministic, synthetic; MXU weights stored bf16)
# ---------------------------------------------------------------------------
def init_params(key, cfg):
    V, E, H, I, L, P = cfg["V"], cfg["E"], cfg["H"], cfg["I"], cfg["L"], cfg["P"]
    keys = iter(jax.random.split(key, 256))

    def w32(shape):
        return 0.02 * jax.random.normal(next(keys), shape, jnp.float32)

    def wbf(shape):
        return w32(shape).astype(jnp.bfloat16)

    def ln_pair(n):
        return 1.0 + w32((1, n)), w32((1, n))

    emb_g, emb_b = ln_pair(E)
    params = {
        "embed_table": w32((V, E)),
        "pos_emb": w32((P, E)),
        "type_emb": w32((2, E)),
        "emb_ln_g": emb_g, "emb_ln_b": emb_b,
        "proj_w": wbf((E, H)), "proj_b": w32((1, H)),
        "layers": [],
    }
    for _ in range(L):
        ln1_g, ln1_b = ln_pair(H)
        ln2_g, ln2_b = ln_pair(H)
        params["layers"].append({
            "wqkv": wbf((H, 3 * H)), "bqkv": w32((1, 3 * H)),   # fused Q|K|V
            "wo": wbf((H, H)), "bo": w32((1, H)),
            "ln1_g": ln1_g, "ln1_b": ln1_b,
            "wi": wbf((H, I)), "bi": w32((1, I)),
            "wo2": wbf((I, H)), "bo2": w32((1, H)),
            "ln2_g": ln2_g, "ln2_b": ln2_b,
        })
    hg, hb = ln_pair(H)
    params["head"] = {
        "w1": wbf((H, H)), "b1": w32((1, H)),
        "ln_g": hg, "ln_b": hb,
        "w2": wbf((H, 2)), "b2": w32((1, 2)),
    }
    return params


# ---------------------------------------------------------------------------
# forward pass using the Pallas kernels
# ---------------------------------------------------------------------------
def electra_forward(params, data, attention_mask, cfg):
    B, S = data.shape
    E, H, nH = cfg["E"], cfg["H"], cfg["nH"]
    hd = H // nH
    M = B * S

    # embedding gather stays in XLA (data-dependent gather)
    we = params["embed_table"][data]                                  # [B,S,E]
    extra = params["pos_emb"][:S][None, :, :] + params["type_emb"][0][None, None, :]
    extra = jnp.broadcast_to(extra, (B, S, E))

    x = pallas_add_layernorm(we.reshape(M, E), extra.reshape(M, E),
                             params["emb_ln_g"], params["emb_ln_b"], eps=1e-12)
    x = pallas_matmul(x, params["proj_w"], params["proj_b"])          # [M,H] bf16

    # additive key mask (HF-style), [B, 1, S]
    bias = ((1.0 - attention_mask.astype(jnp.float32)) * -1e9)[:, None, :]
    scale = 1.0 / math.sqrt(hd)

    for layer in params["layers"]:
        # fused QKV projection -> three [M,H] outputs (no XLA split/transpose)
        q, k, v = pallas_qkv(x, layer["wqkv"], layer["bqkv"], H)
        ctx = pallas_flash_attention(q.reshape(B, S, H), k.reshape(B, S, H),
                                     v.reshape(B, S, H), bias, scale, nH)
        ctx = ctx.reshape(M, H)                                       # free reshape

        # output projection with fused residual-add + LayerNorm epilogue
        x = pallas_matmul(ctx, layer["wo"], layer["bo"], residual=x,
                          ln=(layer["ln1_g"], layer["ln1_b"]), eps=1e-12)
        # fused FFN (GELU, down-proj, residual, LayerNorm; [M,I] never hits HBM)
        x = pallas_ffn(x, layer["wi"], layer["bi"], layer["wo2"], layer["bo2"],
                       layer["ln2_g"], layer["ln2_b"], eps=1e-12)

    cls_tok = x.reshape(B, S, H)[:, 0, :]                             # [B,H]

    # ModuleList holds the SAME head module -> compute once, replicate
    score = pallas_head(cls_tok, params["head"], eps=1e-5)
    return [score for _ in range(cfg["num_tasks"])]


# ---------------------------------------------------------------------------
# pure-JAX fp32 reference (same math) for a correctness check
# ---------------------------------------------------------------------------
def _ln_ref(h, g, b, eps):
    mu = jnp.mean(h, axis=-1, keepdims=True)
    var = jnp.mean((h - mu) ** 2, axis=-1, keepdims=True)
    return (h - mu) * jax.lax.rsqrt(var + eps) * g + b


def ref_forward(params, data, attention_mask, cfg):
    p = jax.tree_util.tree_map(lambda a: a.astype(jnp.float32), params)
    B, S = data.shape
    E, H, nH = cfg["E"], cfg["H"], cfg["nH"]
    hd = H // nH

    we = p["embed_table"][data]
    x = we + p["pos_emb"][:S][None, :, :] + p["type_emb"][0][None, None, :]
    x = _ln_ref(x, p["emb_ln_g"], p["emb_ln_b"], 1e-12)
    x = x @ p["proj_w"] + p["proj_b"]
    bias = (1.0 - attention_mask.astype(jnp.float32))[:, None, None, :] * -1e9

    for layer in p["layers"]:
        wq, wk, wv = (layer["wqkv"][:, :H], layer["wqkv"][:, H:2 * H],
                      layer["wqkv"][:, 2 * H:])
        bq, bk, bv = (layer["bqkv"][:, :H], layer["bqkv"][:, H:2 * H],
                      layer["bqkv"][:, 2 * H:])

        def heads(t):
            return t.reshape(B, S, nH, hd).transpose(0, 2, 1, 3)

        q = heads(x @ wq + bq)
        k = heads(x @ wk + bk)
        v = heads(x @ wv + bv)
        s = jnp.einsum("bhqd,bhkd->bhqk", q, k) / math.sqrt(hd) + bias
        pr = jax.nn.softmax(s, axis=-1)
        ctx = jnp.einsum("bhqk,bhkd->bhqd", pr, v).transpose(0, 2, 1, 3).reshape(B, S, H)
        attn_out = ctx @ layer["wo"] + layer["bo"]
        x = _ln_ref(attn_out + x, layer["ln1_g"], layer["ln1_b"], 1e-12)
        inter = jax.nn.gelu(x @ layer["wi"] + layer["bi"], approximate=False)
        out = inter @ layer["wo2"] + layer["bo2"]
        x = _ln_ref(out + x, layer["ln2_g"], layer["ln2_b"], 1e-12)

    cls_tok = x[:, 0, :]
    hp = p["head"]
    h = cls_tok @ hp["w1"] + hp["b1"]
    h = _ln_ref(h, hp["ln_g"], hp["ln_b"], 1e-5)
    sc = h @ hp["w2"] + hp["b2"]
    return jax.nn.softmax(sc, axis=1)


# ---------------------------------------------------------------------------
if __name__ == "__main__":
    cfg = dict(V=50, E=16, H=32, nH=4, I=64, L=2, P=16, num_tasks=3)
    B, S = 2, 8

    key = jax.random.PRNGKey(0)
    kp, kd = jax.random.split(key)
    params = init_params(kp, cfg)

    data = jax.random.randint(kd, (B, S), 0, cfg["V"], dtype=jnp.int32)
    attention_mask = jnp.ones((B, S), jnp.int32).at[1, 6:].set(0)

    scores = electra_forward(params, data, attention_mask, cfg)
    scores = jax.block_until_ready(scores)

    ref = np.asarray(ref_forward(params, data, attention_mask, cfg))
    for s in scores:
        np.testing.assert_allclose(np.asarray(s), ref, rtol=2e-2, atol=2e-2)

    print("KERNEL_OK")
</pallas_src>

<mosaic_0001>
module attributes {stable_mosaic.version = 11 : i64} {
  func.func @_add_ln_kernel(%arg0: i32, %arg1: memref<16x16xf32, #tpu.memory_space<vmem>>, %arg2: memref<16x16xf32, #tpu.memory_space<vmem>>, %arg3: memref<1x16xf32, #tpu.memory_space<vmem>>, %arg4: memref<1x16xf32, #tpu.memory_space<vmem>>, %arg5: memref<16x16xbf16, #tpu.memory_space<vmem>>) attributes {dimension_semantics = [#tpu.dimension_semantics<parallel>], iteration_bounds = array<i64: 1>, scalar_prefetch = 0 : i64, scratch_operands = 0 : i64, tpu.core_type = #tpu.core_type<tc>, window_params = [{transform_indices = @transform_0, window_bounds = array<i64: 16, 16>}, {transform_indices = @transform_1, window_bounds = array<i64: 16, 16>}, {pipeline_mode = #tpu.pipeline_mode<synchronous>, transform_indices = @transform_2, window_bounds = array<i64: 1, 16>}, {pipeline_mode = #tpu.pipeline_mode<synchronous>, transform_indices = @transform_3, window_bounds = array<i64: 1, 16>}, {transform_indices = @transform_4, window_bounds = array<i64: 16, 16>}]} {
    %c0 = arith.constant 0 : index
    %c0_0 = arith.constant 0 : index
    %0 = vector.load %arg1[%c0, %c0_0] : memref<16x16xf32, #tpu.memory_space<vmem>>, vector<16x16xf32>
    %c0_1 = arith.constant 0 : index
    %c0_2 = arith.constant 0 : index
    %1 = vector.load %arg2[%c0_1, %c0_2] : memref<16x16xf32, #tpu.memory_space<vmem>>, vector<16x16xf32>
    %2 = arith.addf %0, %1 : vector<16x16xf32>
    %c0_3 = arith.constant 0 : index
    %c0_4 = arith.constant 0 : index
    %3 = vector.load %arg3[%c0_3, %c0_4] : memref<1x16xf32, #tpu.memory_space<vmem>>, vector<1x16xf32>
    %c0_5 = arith.constant 0 : index
    %c0_6 = arith.constant 0 : index
    %4 = vector.load %arg4[%c0_5, %c0_6] : memref<1x16xf32, #tpu.memory_space<vmem>>, vector<1x16xf32>
    %cst = arith.constant dense<0.000000e+00> : vector<16xf32>
    %5 = vector.multi_reduction <add>, %2, %cst [1] : vector<16x16xf32> to vector<16xf32>
    %6 = vector.shape_cast %5 : vector<16xf32> to vector<16x1xf32>
    %cst_7 = arith.constant 1.600000e+01 : f32
    %7 = vector.broadcast %cst_7 : f32 to vector<16x1xf32>
    %8 = arith.divf %6, %7 : vector<16x1xf32>
    %9 = vector.broadcast %8 : vector<16x1xf32> to vector<16x16xf32>
    %10 = arith.subf %2, %9 : vector<16x16xf32>
    %11 = arith.mulf %10, %10 : vector<16x16xf32>
    %cst_8 = arith.constant dense<0.000000e+00> : vector<16xf32>
    %12 = vector.multi_reduction <add>, %11, %cst_8 [1] : vector<16x16xf32> to vector<16xf32>
    %13 = vector.shape_cast %12 : vector<16xf32> to vector<16x1xf32>
    %cst_9 = arith.constant 1.600000e+01 : f32
    %14 = vector.broadcast %cst_9 : f32 to vector<16x1xf32>
    %15 = arith.divf %13, %14 : vector<16x1xf32>
    %16 = vector.broadcast %8 : vector<16x1xf32> to vector<16x16xf32>
    %17 = arith.subf %2, %16 : vector<16x16xf32>
    %cst_10 = arith.constant 9.99999996E-13 : f32
    %18 = vector.broadcast %cst_10 : f32 to vector<16x1xf32>
    %19 = arith.addf %15, %18 : vector<16x1xf32>
    %20 = math.rsqrt %19 : vector<16x1xf32>
    %21 = vector.broadcast %20 : vector<16x1xf32> to vector<16x16xf32>
    %22 = arith.mulf %17, %21 : vector<16x16xf32>
    %23 = vector.broadcast %3 : vector<1x16xf32> to vector<16x16xf32>
    %24 = arith.mulf %22, %23 : vector<16x16xf32>
    %25 = vector.broadcast %4 : vector<1x16xf32> to vector<16x16xf32>
    %26 = arith.addf %24, %25 : vector<16x16xf32>
    %27 = arith.truncf %26 : vector<16x16xf32> to vector<16x16xbf16>
    %c0_11 = arith.constant 0 : index
    %c0_12 = arith.constant 0 : index
    %28 = vector.load %arg5[%c0_11, %c0_12] : memref<16x16xbf16, #tpu.memory_space<vmem>>, vector<16x16xbf16>
    tpu.vector_store %arg5[%c0_11, %c0_12], %27 {strides = array<i32>} : memref<16x16xbf16, #tpu.memory_space<vmem>>, vector<16x16xbf16>,
    return
  }
  func.func @transform_0(%arg0: i32) -> (i32, i32) {
    %c0_i32 = arith.constant 0 : i32
    %c0_i32_0 = arith.constant 0 : i32
    return %arg0, %c0_i32 : i32, i32
  }
  func.func @transform_1(%arg0: i32) -> (i32, i32) {
    %c0_i32 = arith.constant 0 : i32
    %c0_i32_0 = arith.constant 0 : i32
    return %arg0, %c0_i32 : i32, i32
  }
  func.func @transform_2(%arg0: i32) -> (i32, i32) {
    %c0_i32 = arith.constant 0 : i32
    %c0_i32_0 = arith.constant 0 : i32
    %c0_i32_1 = arith.constant 0 : i32
    return %c0_i32, %c0_i32_0 : i32, i32
  }
  func.func @transform_3(%arg0: i32) -> (i32, i32) {
    %c0_i32 = arith.constant 0 : i32
    %c0_i32_0 = arith.constant 0 : i32
    %c0_i32_1 = arith.constant 0 : i32
    return %c0_i32, %c0_i32_0 : i32, i32
  }
  func.func @transform_4(%arg0: i32) -> (i32, i32) {
    %c0_i32 = arith.constant 0 : i32
    %c0_i32_0 = arith.constant 0 : i32
    return %arg0, %c0_i32 : i32, i32
  }
}

</mosaic_0001>

<llo_original>
// kernel: tpu_custom_call.1
$region0: #{tpu_custom_call.1}
  #allocation0 [shape = 'u32[]', space=smem, size = 0x4, offset = 0x4, fixed_abs, tag = 'smem constant byte address 0x4 - core index']
  #allocation1 [shape = 'u32[144,128]{1,0:T(1,128)}', space=vmem, size = 0x12000, scoped, tag = 'internal scratch']
  %s0 = inlined_call_operand.hbm [shape: f32[16,16], index: 0, kind: input, shape index: {}]
  %s1 = inlined_call_operand.hbm [shape: f32[16,16], index: 1, kind: input, shape index: {}]
  %s2 = inlined_call_operand.vmem [shape: f32[1,16], index: 2, kind: input, shape index: {}]
  %s3 = inlined_call_operand.vmem [shape: f32[1,16], index: 3, kind: input, shape index: {}]
  %s4 = inlined_call_operand.hbm [shape: bf16[16,16], index: 4, kind: output, shape index: {}]
  %s5 = sld [smem:[#allocation0]]
  $region34: #{tpu_custom_call.1} parent=0
    _
  %s7 = ssub.s32 1, %s5
  %s8 = scalar_select 0, %s7, %s5
  $region1: #{tpu_custom_call.1} parent=0
    #allocation2 [shape = 'u8[8192]{0}', space=vmem, size = 0x2000, scoped, tag = 'input window, operand 0, single buffered']
    #allocation3 [shape = 's32[1]{0}', space=sflag, size = 0x4, scoped, tag = 'scoped memory for tpu_custom_call.1']
    #allocation4 [shape = 's32[1]{0}', space=sflag, size = 0x4, scoped, tag = 'scoped memory for tpu_custom_call.1']
    #allocation5 [shape = 'u8[8192]{0}', space=vmem, size = 0x2000, scoped, tag = 'input window, operand 1, single buffered']
    #allocation6 [shape = 's32[1]{0}', space=sflag, size = 0x4, scoped, tag = 'scoped memory for tpu_custom_call.1']
    #allocation7 [shape = 'u8[4096]{0}', space=vmem, size = 0x1000, scoped, tag = 'output window, operand 0, single buffered']
    %9 = vsyncpa [#allocation3], 0
    %10 = vsyncpa [#allocation6], 0
    %11 = vsyncpa [#allocation4], 0
    // Predicated region
    $region2: #{tpu_custom_call.1} parent=1 // pred_check
      _
    $region3: #{tpu_custom_call.1} parent=1 // pred_check_branch
      %13 = sbr.rel (0) target = $region5
    $region4: #{tpu_custom_call.1} parent=1 // pred_region
      %s15 = ssub.s32 256, 256
      %16 = vsyncadd [#allocation3], %s15
      %s17 = sshll.u32 [#allocation2], 4
      %s18 = int_to_ptr.vmem [resolvable:$true] %s17
      %23 = dma.hbm_to_vmem [thread:$0]  %s0, 256, %s18, [#allocation3], 128, 128, 8
    $region5: #{tpu_custom_call.1} parent=1 // pred_fallthru
      _
    // Predicated region
    $region6: #{tpu_custom_call.1} parent=1 // pred_check
      _
    $region7: #{tpu_custom_call.1} parent=1 // pred_check_branch
      %25 = sbr.rel (0) target = $region9
    $region8: #{tpu_custom_call.1} parent=1 // pred_region
      %s27 = ssub.s32 256, 256
      %28 = vsyncadd [#allocation6], %s27
      %s29 = sshll.u32 [#allocation5], 4
      %s30 = int_to_ptr.vmem [resolvable:$true] %s29
      %35 = dma.hbm_to_vmem [thread:$0]  %s1, 256, %s30, [#allocation6], 128, 128, 8
    $region9: #{tpu_custom_call.1} parent=1 // pred_fallthru
      _
    // Predicated region
    $region10: #{tpu_custom_call.1} parent=1 // pred_check
      _
    $region11: #{tpu_custom_call.1} parent=1 // pred_check_branch
      %37 = sbr.rel (0) target = $region13
    $region12: #{tpu_custom_call.1} parent=1 // pred_region
      _
    $region13: #{tpu_custom_call.1} parent=1 // pred_fallthru
      _
    // Predicated region
    $region14: #{tpu_custom_call.1} parent=1 // pred_check
      _
    $region15: #{tpu_custom_call.1} parent=1 // pred_check_branch
      %39 = sbr.rel (0) target = $region17
    $region16: #{tpu_custom_call.1} parent=1 // pred_region
      _
    $region17: #{tpu_custom_call.1} parent=1 // pred_fallthru
      _
    // Predicated region
    $region18: #{tpu_custom_call.1} parent=1 // pred_check
      _
    $region19: #{tpu_custom_call.1} parent=1 // pred_check_branch
      %41 = sbr.rel (0) target = $region21
    $region20: #{tpu_custom_call.1} parent=1 // pred_region
      %42 = dma.done [#allocation3], 256
    $region21: #{tpu_custom_call.1} parent=1 // pred_fallthru
      _
    // Predicated region
    $region22: #{tpu_custom_call.1} parent=1 // pred_check
      _
    $region23: #{tpu_custom_call.1} parent=1 // pred_check_branch
      %44 = sbr.rel (0) target = $region25
    $region24: #{tpu_custom_call.1} parent=1 // pred_region
      %45 = dma.done [#allocation6], 256
    $region25: #{tpu_custom_call.1} parent=1 // pred_fallthru
      _
    %v46 = vld [vmem:[#allocation2] sm:$0xff]
    %v47 = vld [vmem:[#allocation2 + $0x8] sm:$0xff]
    %v48 = vld [vmem:[#allocation5] sm:$0xff]
    %v49 = vld [vmem:[#allocation5 + $0x8] sm:$0xff]
    %v50 = vadd.f32 %v46, %v48
    %v51 = vadd.f32 %v47, %v49
    %v52 = vld [vmem:[%s2] sm:$0x1]
    %v53 = vld [vmem:[%s3] sm:$0x1]
    %vm54 = vcmask 130048
    %v55 = vsel %vm54, %v50, 0.0
    %56 = vadd.xlane.f32.xlu0 %v55
    %v57 = vpop.xlane.xlu0 %56
    %v58 = vsel %vm54, %v51, 0.0
    %59 = vadd.xlane.f32.xlu0 %v58
    %v60 = vpop.xlane.xlu0 %59
    %v61 = vrcp.pop 16.0
    %v62 = vmul.f32 %v57, %v61
    %v63 = vmul.f32 %v60, %v61
    %v64 = vsub.f32 %v50, %v62
    %v65 = vsub.f32 %v51, %v63
    %v66 = vmul.f32 %v64, %v64
    %v67 = vmul.f32 %v65, %v65
    %v68 = vsel %vm54, %v66, 0.0
    %69 = vadd.xlane.f32.xlu0 %v68
    %v70 = vpop.xlane.xlu0 %69
    %v71 = vsel %vm54, %v67, 0.0
    %72 = vadd.xlane.f32.xlu0 %v71
    %v73 = vpop.xlane.xlu0 %72
    %v74 = vmul.f32 %v70, %v61
    %v75 = vmul.f32 %v73, %v61
    %v76 = vadd.f32 %v74, 1e-12
    %v77 = vadd.f32 %v75, 1e-12
    %v78 = vrsqrt.pop %v76
    %v79 = vrsqrt.pop %v77
    %v80 = vmul.f32 %v64, %v78
    %v81 = vmul.f32 %v65, %v79
    %v83 = vlaneseq
    %v84 = vshrl.u32 %v83, 7
    %v85 = vsub.s32 0, %v84
    %v86 = vrot.slane %v52, %v85
    %v88 = vmul.f32 %v80, %v86
    %v89 = vmul.f32 %v81, %v86
    %v91 = vlaneseq
    %v92 = vshrl.u32 %v91, 7
    %v93 = vsub.s32 0, %v92
    %v94 = vrot.slane %v53, %v93
    %v96 = vadd.f32 %v88, %v94
    %v97 = vadd.f32 %v89, %v94
    %v98 = vpack.c.bf16 %v97, %v96
    %v100 = vunpack.c.l.b16 %v98
    %v101 = vunpack.c.h.b16 %v98
    %v102 = vpack.c.b16 %v100, %v100
    %v103 = vpack.c.b16 %v101, %v101
    %vm106 = vcmask 125952
    %107 = vst.msk [vmem:[#allocation7] sm:$0xf] %vm106, %v102
    %108 = vst.msk [vmem:[#allocation7 + $0x4] sm:$0xf] %vm106, %v103
    // Predicated region
    $region26: #{tpu_custom_call.1} parent=1 // pred_check
      _
    $region27: #{tpu_custom_call.1} parent=1 // pred_check_branch
      %110 = sbr.rel (0) target = $region29
    $region28: #{tpu_custom_call.1} parent=1 // pred_region
      %s112 = ssub.s32 128, 128
      %113 = vsyncadd [#allocation4], %s112
      %s114 = sshll.u32 [#allocation7], 4
      %s115 = int_to_ptr.vmem [resolvable:$true] %s114
      %120 = dma.vmem_to_hbm [thread:$0]  %s115, 128, %s4, [#allocation4], 64, 64, 4
    $region29: #{tpu_custom_call.1} parent=1 // pred_fallthru
      _
    // Predicated region
    $region30: #{tpu_custom_call.1} parent=1 // pred_check
      _
    $region31: #{tpu_custom_call.1} parent=1 // pred_check_branch
      %122 = sbr.rel (0) target = $region33
    $region32: #{tpu_custom_call.1} parent=1 // pred_region
      %123 = dma.done [#allocation4], 128
    $region33: #{tpu_custom_call.1} parent=1 // pred_fallthru
      _
    %124 = vsyncpa [#allocation3], 1
    %125 = vsyncpa [#allocation6], 1
    %126 = vsyncpa [#allocation4], 1

</llo_original>
